<compile_context>
chip_gen: v7x
topology: tpu7x:2x2x1
jax: 0.10.0
libtpu: 0.0.40
codegen_flags: <defaults>
</compile_context>

<pallas_src>
import functools

import jax
import jax.numpy as jnp
from jax.experimental import pallas as pl
from jax.experimental.pallas import tpu as pltpu

_F32_BYTES = 4
_LANE = 128
_SUBLANE = 8

# Scoped-VMEM ceiling requested from Mosaic and the slice of it the pipelined
# tiles may use (headroom for compiler-internal scratch).
_VMEM_LIMIT_BYTES = 48 * 1024 * 1024
_TILE_VMEM_BUDGET = int(_VMEM_LIMIT_BYTES * 0.75)
_MAX_BATCH_TILE = 2048


def _round_up(x, m):
    return ((x + m - 1) // m) * m


def _cdiv(a, b):
    return (a + b - 1) // b


def _vmem_tile_bytes(rows, cols):
    # f32 tile footprint after (sublane, lane) layout padding.
    return _round_up(max(rows, 1), _SUBLANE) * _round_up(max(cols, 1), _LANE) * _F32_BYTES


def _pick_col_window(state_dim, slot_lo, width):
    """Smallest 128-multiple column block containing [slot_lo, slot_lo+width).

    Returns (col_block_width, col_block_index, offset_inside_block).
    Falls back to the full state_dim when no narrower aligned block covers it.
    """
    cw = _LANE
    while cw < state_dim:
        j = slot_lo // cw
        if (j + 1) * cw >= slot_lo + width:
            return cw, j, slot_lo - j * cw
        cw += _LANE
    return state_dim, 0, slot_lo


def _pick_batch_tile(batch, state_cols, out_cols, const_bytes):
    """VMEM-budgeted, padding-aware batch tile (multiple of 8 sublanes)."""
    # Double-buffered state tile + double-buffered out tile, per row.
    per_row = 2 * _F32_BYTES * (_round_up(state_cols, _LANE) + _round_up(out_cols, _LANE))
    cap = (_TILE_VMEM_BUDGET - const_bytes) // per_row
    cap = max(_SUBLANE, (cap // _SUBLANE) * _SUBLANE)
    cap = min(cap, _MAX_BATCH_TILE)
    # v7x: keep >= 2 grid steps whenever batch allows, so "parallel" can shard
    # the batch over both TensorCores (harmless on single-TC v5e/v6e).
    if batch >= 2 * _SUBLANE:
        cap = min(cap, _round_up(_cdiv(batch, 2), _SUBLANE))
    # Even out the grid steps -> minimal tail padding.
    n_steps = max(1, _cdiv(batch, cap))
    return _round_up(_cdiv(batch, n_steps), _SUBLANE)


def _kg_reasoning_kernel(state_ref, prio_ref, w_ref, out_ref, *, off, sym_num):
    # state_ref : (TB, CW)            f32 — column super-window of the state
    # prio_ref  : (1, sym_num)        f32 — symptom prior (implicit broadcast)
    # w_ref     : (sym_num, OUT_COLS) f32 — fused constant
    # out_ref   : (TB, OUT_COLS)      f32
    slots = state_ref[:, off:off + sym_num]
    prio = prio_ref[...]                                    # (1, sym_num)
    # Fused: where(slots==0, prio, slots) then where(.==-2, prio, .)
    #        == where((slots==0)|(slots==-2), prio, slots)   (exact equivalence)
    p = jnp.where((slots == 0.0) | (slots == -2.0), prio, slots)
    # One matmul emits the full action row (zero prefix included) ->
    # single lane-dense store.
    out_ref[...] = jnp.dot(p, w_ref[...], preferred_element_type=jnp.float32)


def make_knowledge_graph_reasoning(sym_prio, sym_dise_mat, dise_sym_mat, *,
                                   num_actions, dise_start, act_cardinality,
                                   slot_cardinality):
    """Factory: precomputes the fused constants once, returns forward(state)."""
    sym_dise = jnp.asarray(sym_dise_mat, jnp.float32)       # (sym_num, dise_num)
    dise_sym = jnp.asarray(dise_sym_mat, jnp.float32)       # (dise_num, sym_num)
    dise_num, sym_num = dise_sym.shape

    slot_lo = 2 * act_cardinality + dise_num + 1            # start of slot window
    assert (2 * act_cardinality + slot_cardinality) - slot_lo == sym_num, \
        "slot window width must equal sym_num"
    assert num_actions >= dise_start + dise_num + sym_num

    # Output lane padding only when num_actions is large and lane-misaligned.
    if num_actions >= 2 * _LANE and num_actions % _LANE != 0:
        out_cols = _round_up(num_actions, _LANE)
    else:
        out_cols = num_actions

    # Fused constant weight (built ONCE): p @ W == [0..0 | dise_prob | sym_prob].
    w = jnp.zeros((sym_num, out_cols), jnp.float32)
    w = w.at[:, dise_start:dise_start + dise_num].set(sym_dise)
    w = w.at[:, dise_start + dise_num:dise_start + dise_num + sym_num].set(
        sym_dise @ dise_sym)
    prio2d = jnp.asarray(sym_prio, jnp.float32).reshape(1, sym_num)

    # Resident constants (counted twice: conservative vs. default double-buffer).
    const_bytes = 2 * _vmem_tile_bytes(sym_num, out_cols) + 2 * _vmem_tile_bytes(1, sym_num)

    def forward(state):
        state = jnp.asarray(state, jnp.float32)
        batch, state_dim = state.shape

        cw, col_blk, off = _pick_col_window(state_dim, slot_lo, sym_num)
        tb = _pick_batch_tile(batch, cw, out_cols, const_bytes)
        n_steps = _cdiv(batch, tb)
        padded_batch = n_steps * tb
        if padded_batch != batch:
            state = jnp.pad(state, ((0, padded_batch - batch), (0, 0)))

        kernel = functools.partial(_kg_reasoning_kernel, off=off, sym_num=sym_num)

        out = pl.pallas_call(
            kernel,
            out_shape=jax.ShapeDtypeStruct((padded_batch, out_cols), jnp.float32),
            grid=(n_steps,),
            in_specs=[
                pl.BlockSpec((tb, cw), lambda i: (i, col_blk)),
                pl.BlockSpec((1, sym_num), lambda i: (0, 0)),
                pl.BlockSpec((sym_num, out_cols), lambda i: (0, 0)),
            ],
            out_specs=pl.BlockSpec((tb, out_cols), lambda i: (i, 0)),
            compiler_params=pltpu.CompilerParams(
                dimension_semantics=("parallel",),
                vmem_limit_bytes=_VMEM_LIMIT_BYTES),
        )(state, prio2d, w)

        if padded_batch != batch:
            out = out[:batch]
        if out_cols != num_actions:
            out = out[:, :num_actions]
        return out

    return forward


def knowledge_graph_reasoning(state, sym_prio, sym_dise_mat, dise_sym_mat, *,
                              num_actions, dise_start, act_cardinality,
                              slot_cardinality):
    """One-off convenience wrapper (prefer the factory for repeated calls)."""
    fwd = make_knowledge_graph_reasoning(
        sym_prio, sym_dise_mat, dise_sym_mat,
        num_actions=num_actions, dise_start=dise_start,
        act_cardinality=act_cardinality, slot_cardinality=slot_cardinality)
    return fwd(state)


def reference(state, sym_prio, sym_dise_mat, dise_sym_mat, *, num_actions,
              dise_start, act_cardinality, slot_cardinality):
    # Pure-JAX mirror of the PyTorch forward (unfused matmuls).
    dise_num, sym_num = dise_sym_mat.shape
    batch = state.shape[0]
    lo = 2 * act_cardinality + dise_num + 1
    hi = 2 * act_cardinality + slot_cardinality
    slots = state[:, lo:hi]
    prio = jnp.broadcast_to(sym_prio[None, :], slots.shape)
    p = jnp.where(slots == 0.0, prio, slots)
    p = jnp.where(p == -2.0, prio, p)
    dise_prob = p @ sym_dise_mat
    sym_prob = dise_prob @ dise_sym_mat
    action = jnp.zeros((batch, num_actions), jnp.float32)
    action = action.at[:, dise_start:dise_start + dise_num].set(dise_prob)
    action = action.at[:, dise_start + dise_num:].set(sym_prob)
    return action


if __name__ == "__main__":
    # Small, mutually-consistent sizes implied by the module:
    #   dise_sym_mat: (dise_num, sym_num), sym_dise_mat: (sym_num, dise_num)
    #   sym_prio: (sym_num,), slot_cardinality = dise_num + sym_num + 1
    #   num_actions = dise_start + dise_num + sym_num
    batch = 2
    act_cardinality = 8
    dise_num = 5
    sym_num = 16
    slot_cardinality = dise_num + sym_num + 1               # 22
    dise_start = 3
    num_actions = dise_start + dise_num + sym_num            # 24
    state_dim = 2 * act_cardinality + slot_cardinality + 2   # 40

    key = jax.random.PRNGKey(0)
    k1, k2, k3, k4, k5 = jax.random.split(key, 5)

    state = jax.random.normal(k1, (batch, state_dim), dtype=jnp.float32)
    # Exercise the 0 / -2 sentinel cases in the slot region.
    slot_vals = jax.random.choice(
        k2, jnp.array([0.0, -2.0, 1.0, 0.5], jnp.float32), (batch, sym_num))
    lo = 2 * act_cardinality + dise_num + 1
    hi = 2 * act_cardinality + slot_cardinality
    state = state.at[:, lo:hi].set(slot_vals)

    sym_prio = jax.random.uniform(k3, (sym_num,), dtype=jnp.float32)
    dise_sym_mat = jax.random.uniform(k4, (dise_num, sym_num), dtype=jnp.float32)
    sym_dise_mat = jax.random.uniform(k5, (sym_num, dise_num), dtype=jnp.float32)

    kwargs = dict(num_actions=num_actions, dise_start=dise_start,
                  act_cardinality=act_cardinality,
                  slot_cardinality=slot_cardinality)

    forward = make_knowledge_graph_reasoning(sym_prio, sym_dise_mat,
                                             dise_sym_mat, **kwargs)
    out = forward(state)
    out = jax.block_until_ready(out)

    ref = reference(state, sym_prio, sym_dise_mat, dise_sym_mat, **kwargs)
    assert out.shape == (batch, num_actions)
    assert jnp.allclose(out, ref, atol=1e-5, rtol=1e-5), "mismatch vs reference"

    print("KERNEL_OK")
</pallas_src>

<mosaic_0001>
module attributes {stable_mosaic.version = 11 : i64} {
  func.func @_kg_reasoning_kernel(%arg0: i32, %arg1: memref<8x40xf32, #tpu.memory_space<vmem>>, %arg2: memref<1x16xf32, #tpu.memory_space<vmem>>, %arg3: memref<16x24xf32, #tpu.memory_space<vmem>>, %arg4: memref<8x24xf32, #tpu.memory_space<vmem>>) attributes {dimension_semantics = [#tpu.dimension_semantics<parallel>], iteration_bounds = array<i64: 1>, scalar_prefetch = 0 : i64, scratch_operands = 0 : i64, tpu.core_type = #tpu.core_type<tc>, window_params = [{transform_indices = @transform_0, window_bounds = array<i64: 8, 40>}, {pipeline_mode = #tpu.pipeline_mode<synchronous>, transform_indices = @transform_1, window_bounds = array<i64: 1, 16>}, {pipeline_mode = #tpu.pipeline_mode<synchronous>, transform_indices = @transform_2, window_bounds = array<i64: 16, 24>}, {transform_indices = @transform_3, window_bounds = array<i64: 8, 24>}]} {
    %c0 = arith.constant 0 : index
    %c22 = arith.constant 22 : index
    %0 = vector.load %arg1[%c0, %c22] : memref<8x40xf32, #tpu.memory_space<vmem>>, vector<8x16xf32>
    %c0_0 = arith.constant 0 : index
    %c0_1 = arith.constant 0 : index
    %1 = vector.load %arg2[%c0_0, %c0_1] : memref<1x16xf32, #tpu.memory_space<vmem>>, vector<1x16xf32>
    %cst = arith.constant 0.000000e+00 : f32
    %2 = vector.broadcast %cst : f32 to vector<8x16xf32>
    %3 = arith.cmpf oeq, %0, %2 : vector<8x16xf32>
    %cst_2 = arith.constant -2.000000e+00 : f32
    %4 = vector.broadcast %cst_2 : f32 to vector<8x16xf32>
    %5 = arith.cmpf oeq, %0, %4 : vector<8x16xf32>
    %6 = arith.ori %3, %5 : vector<8x16xi1>
    %7 = vector.shape_cast %1 : vector<1x16xf32> to vector<1x16xf32>
    %8 = vector.broadcast %7 : vector<1x16xf32> to vector<8x16xf32>
    %9 = arith.select %6, %8, %0 : vector<8x16xi1>, vector<8x16xf32>
    %c0_3 = arith.constant 0 : index
    %c0_4 = arith.constant 0 : index
    %10 = vector.load %arg3[%c0_3, %c0_4] : memref<16x24xf32, #tpu.memory_space<vmem>>, vector<16x24xf32>
    %cst_5 = arith.constant dense<0.000000e+00> : vector<8x24xf32>
    %11 = tpu.matmul %9, %10, %cst_5 {dimension_numbers = #tpu.dot_dimension_numbers<[1], [0], [0], [1], [0, 0, 1, 1], [], []>} : vector<8x16xf32>, vector<16x24xf32>, vector<8x24xf32> -> vector<8x24xf32>
    %c0_6 = arith.constant 0 : index
    %c0_7 = arith.constant 0 : index
    %12 = vector.load %arg4[%c0_6, %c0_7] : memref<8x24xf32, #tpu.memory_space<vmem>>, vector<8x24xf32>
    tpu.vector_store %arg4[%c0_6, %c0_7], %11 {strides = array<i32>} : memref<8x24xf32, #tpu.memory_space<vmem>>, vector<8x24xf32>,
    return
  }
  func.func @transform_0(%arg0: i32) -> (i32, i32) {
    %c0_i32 = arith.constant 0 : i32
    %c0_i32_0 = arith.constant 0 : i32
    return %arg0, %c0_i32 : i32, i32
  }
  func.func @transform_1(%arg0: i32) -> (i32, i32) {
    %c0_i32 = arith.constant 0 : i32
    %c0_i32_0 = arith.constant 0 : i32
    %c0_i32_1 = arith.constant 0 : i32
    return %c0_i32, %c0_i32_0 : i32, i32
  }
  func.func @transform_2(%arg0: i32) -> (i32, i32) {
    %c0_i32 = arith.constant 0 : i32
    %c0_i32_0 = arith.constant 0 : i32
    %c0_i32_1 = arith.constant 0 : i32
    return %c0_i32, %c0_i32_0 : i32, i32
  }
  func.func @transform_3(%arg0: i32) -> (i32, i32) {
    %c0_i32 = arith.constant 0 : i32
    %c0_i32_0 = arith.constant 0 : i32
    return %arg0, %c0_i32 : i32, i32
  }
}

</mosaic_0001>

<llo_original>
// kernel: tpu_custom_call.1
$region0: #{tpu_custom_call.1}
  #allocation0 [shape = 'u32[]', space=smem, size = 0x4, offset = 0x4, fixed_abs, tag = 'smem constant byte address 0x4 - core index']
  #allocation1 [shape = 'u32[144,128]{1,0:T(1,128)}', space=vmem, size = 0x12000, scoped, tag = 'internal scratch']
  %s0 = inlined_call_operand.hbm [shape: f32[8,40], index: 0, kind: input, shape index: {}]
  %s1 = inlined_call_operand.vmem [shape: f32[1,16], index: 1, kind: input, shape index: {}]
  %s2 = inlined_call_operand.hbm [shape: f32[16,24], index: 2, kind: input, shape index: {}]
  %s3 = inlined_call_operand.hbm [shape: f32[8,24], index: 3, kind: output, shape index: {}]
  %s4 = sld [smem:[#allocation0]]
  $region30: #{tpu_custom_call.1} parent=0
    _
  %s6 = ssub.s32 1, %s4
  %s7 = scalar_select 0, %s6, %s4
  $region1: #{tpu_custom_call.1} parent=0
    #allocation2 [shape = 'u8[4096]{0}', space=vmem, size = 0x1000, scoped, tag = 'input window, operand 0, single buffered']
    #allocation3 [shape = 's32[1]{0}', space=sflag, size = 0x4, scoped, tag = 'scoped memory for tpu_custom_call.1']
    #allocation4 [shape = 's32[1]{0}', space=sflag, size = 0x4, scoped, tag = 'scoped memory for tpu_custom_call.1']
    #allocation5 [shape = 'u8[8192]{0}', space=vmem, size = 0x2000, scoped, tag = 'input window, operand 2, single buffered']
    #allocation6 [shape = 's32[1]{0}', space=sflag, size = 0x4, scoped, tag = 'scoped memory for tpu_custom_call.1']
    #allocation7 [shape = 'u8[4096]{0}', space=vmem, size = 0x1000, scoped, tag = 'output window, operand 0, single buffered']
    %8 = vsyncpa [#allocation3], 0
    %9 = vsyncpa [#allocation6], 0
    %10 = vsyncpa [#allocation4], 0
    // Predicated region
    $region2: #{tpu_custom_call.1} parent=1 // pred_check
      _
    $region3: #{tpu_custom_call.1} parent=1 // pred_check_branch
      %12 = sbr.rel (0) target = $region5
    $region4: #{tpu_custom_call.1} parent=1 // pred_region
      %s14 = ssub.s32 128, 128
      %15 = vsyncadd [#allocation3], %s14
      %s17 = sshll.u32 [#allocation2], 4
      %s18 = int_to_ptr.vmem [resolvable:$true] %s17
      %20 = dma.hbm_to_vmem [thread:$0]  %s0, 128, %s18, [#allocation3]
    $region5: #{tpu_custom_call.1} parent=1 // pred_fallthru
      _
    // Predicated region
    $region6: #{tpu_custom_call.1} parent=1 // pred_check
      _
    $region7: #{tpu_custom_call.1} parent=1 // pred_check_branch
      %22 = sbr.rel (0) target = $region9
    $region8: #{tpu_custom_call.1} parent=1 // pred_region
      _
    $region9: #{tpu_custom_call.1} parent=1 // pred_fallthru
      _
    // Predicated region
    $region10: #{tpu_custom_call.1} parent=1 // pred_check
      _
    $region11: #{tpu_custom_call.1} parent=1 // pred_check_branch
      %24 = sbr.rel (0) target = $region13
    $region12: #{tpu_custom_call.1} parent=1 // pred_region
      %s26 = ssub.s32 256, 256
      %27 = vsyncadd [#allocation6], %s26
      %s28 = sshll.u32 [#allocation5], 4
      %s29 = int_to_ptr.vmem [resolvable:$true] %s28
      %34 = dma.hbm_to_vmem [thread:$0]  %s2, 256, %s29, [#allocation6], 128, 128, 8
    $region13: #{tpu_custom_call.1} parent=1 // pred_fallthru
      _
    // Predicated region
    $region14: #{tpu_custom_call.1} parent=1 // pred_check
      _
    $region15: #{tpu_custom_call.1} parent=1 // pred_check_branch
      %36 = sbr.rel (0) target = $region17
    $region16: #{tpu_custom_call.1} parent=1 // pred_region
      %37 = dma.done [#allocation3], 128
    $region17: #{tpu_custom_call.1} parent=1 // pred_fallthru
      _
    // Predicated region
    $region18: #{tpu_custom_call.1} parent=1 // pred_check
      _
    $region19: #{tpu_custom_call.1} parent=1 // pred_check_branch
      %39 = sbr.rel (0) target = $region21
    $region20: #{tpu_custom_call.1} parent=1 // pred_region
      %40 = dma.done [#allocation6], 256
    $region21: #{tpu_custom_call.1} parent=1 // pred_fallthru
      _
    %v41 = vld [vmem:[#allocation2] sm:$0xff]
    %v42 = vld [vmem:[%s1] sm:$0x1]
    %vm43 = vcmp.eq.f32.partialorder %v41, 0.0
    %vm44 = vcmp.eq.f32.partialorder %v41, -2.0
    %vm45 = vmor %vm43, %vm44
    %v47 = vlaneseq
    %v48 = vshrl.u32 %v47, 7
    %v49 = vsub.s32 0, %v48
    %v50 = vrot.slane %v42, %v49
    %51 = vrot.lane.b32.xlu0 %v50, 22
    %v52 = vpop.permute.xlu0 %51
    %v54 = vsel %vm45, %v52, %v41
    %v55 = vld [vmem:[#allocation5] sm:$0xff]
    %v56 = vld [vmem:[#allocation5 + $0x8] sm:$0xff]
    %58 = vrot.lane.b32.xlu0 %v54, 106
    %v59 = vpop.permute.xlu0 %58
    %vm60 = vcmask 130048
    %v61 = vsel %vm60, %v59, 0
    %63 = vmatprep.subr.mxu0 0.0
    %64 = vmatpush1.msra.mxu0 %v55
    %65 = vmatprep.subr.mxu0 0.0
    %66 = vmatpush1.msra.mxu0 %v56
    %67 = vmatprep.subr.mxu0 0.0
    %68 = vmatpush1.msra.mxu0 0.0
    %69 = vmatprep.subr.mxu0 0.0
    %70 = vmatpush1.msra.mxu0 0.0
    %71 = vmatprep.subr.mxu0 0.0
    %72 = vmatpush1.msra.mxu0 0.0
    %73 = vmatprep.subr.mxu0 0.0
    %74 = vmatpush1.msra.mxu0 0.0
    %75 = vmatprep.subr.mxu0 0.0
    %76 = vmatpush1.msra.mxu0 0.0
    %77 = vmatprep.subr.mxu0 0.0
    %78 = vmatpush1.msra.mxu0 0.0
    %79 = vmatprep.subr.mxu0 0.0
    %80 = vmatpush1.msra.mxu0 0.0
    %81 = vmatprep.subr.mxu0 0.0
    %82 = vmatpush1.msra.mxu0 0.0
    %83 = vmatprep.subr.mxu0 0.0
    %84 = vmatpush1.msra.mxu0 0.0
    %85 = vmatprep.subr.mxu0 0.0
    %86 = vmatpush1.msra.mxu0 0.0
    %87 = vmatprep.subr.mxu0 0.0
    %88 = vmatpush1.msra.mxu0 0.0
    %89 = vmatprep.subr.mxu0 0.0
    %90 = vmatpush1.msra.mxu0 0.0
    %91 = vmatprep.subr.mxu0 0.0
    %92 = vmatpush1.msra.mxu0 0.0
    %93 = vmatprep.subr.mxu0 0.0
    %94 = vmatpush1.msra.mxu0 0.0
    %95 = vmatprep.subr.mxu0 0.0
    %96 = vmatpush1.msra.mxu0 0.0
    %97 = vmatprep.subr.mxu0 0.0
    %98 = vmatpush1.msra.mxu0 0.0
    %99 = vmatprep.subr.mxu0 0.0
    %100 = vmatpush1.msra.mxu0 0.0
    %101 = vmatprep.subr.mxu0 0.0
    %102 = vmatpush1.msra.mxu0 0.0
    %103 = vmatprep.subr.mxu0 0.0
    %104 = vmatpush1.msra.mxu0 0.0
    %105 = vmatprep.subr.mxu0 0.0
    %106 = vmatpush1.msra.mxu0 0.0
    %107 = vmatprep.subr.mxu0 0.0
    %108 = vmatpush1.msra.mxu0 0.0
    %109 = vmatprep.subr.mxu0 0.0
    %110 = vmatpush1.msra.mxu0 0.0
    %111 = vmatprep.subr.mxu0 0.0
    %112 = vmatpush1.msra.mxu0 0.0
    %113 = vmatprep.subr.mxu0 0.0
    %114 = vmatpush1.msra.mxu0 0.0
    %115 = vmatprep.subr.mxu0 0.0
    %116 = vmatpush1.msra.mxu0 0.0
    %117 = vmatprep.subr.mxu0 0.0
    %118 = vmatpush1.msra.mxu0 0.0
    %119 = vmatprep.subr.mxu0 0.0
    %120 = vmatpush1.msra.mxu0 0.0
    %121 = vmatprep.subr.mxu0 0.0
    %122 = vmatpush1.msra.mxu0 0.0
    %123 = vmatprep.subr.mxu0 0.0
    %124 = vmatpush1.msra.mxu0 0.0
    %125 = vmatprep.subr.mxu0 0.0
    %126 = vmatpush1.msra.mxu0 0.0
    %127 = vmatprep.mubr.f32.mxu0 0.0
    %128 = vmatmul.mubr.f32.gmra.mrb[0].mxu0 %v61
    %v129 = vpop.f32.mrb[0].mxu0
    %v130 = vadd.f32 0.0, %v129
    %v131 = vpop.f32.mrb[0].mxu0
    %132 = vdwg.mxu0
    %vm133 = vcmask 195584
    %134 = vst.msk [vmem:[#allocation7] sm:$0xff] %vm133, %v130
    // Predicated region
    $region22: #{tpu_custom_call.1} parent=1 // pred_check
      _
    $region23: #{tpu_custom_call.1} parent=1 // pred_check_branch
      %136 = sbr.rel (0) target = $region25
    $region24: #{tpu_custom_call.1} parent=1 // pred_region
      %s138 = ssub.s32 128, 128
      %139 = vsyncadd [#allocation4], %s138
      %s141 = sshll.u32 [#allocation7], 4
      %s142 = int_to_ptr.vmem [resolvable:$true] %s141
      %144 = dma.vmem_to_hbm [thread:$0]  %s142, 128, %s3, [#allocation4]
    $region25: #{tpu_custom_call.1} parent=1 // pred_fallthru
      _
    // Predicated region
    $region26: #{tpu_custom_call.1} parent=1 // pred_check
      _
    $region27: #{tpu_custom_call.1} parent=1 // pred_check_branch
      %146 = sbr.rel (0) target = $region29
    $region28: #{tpu_custom_call.1} parent=1 // pred_region
      %147 = dma.done [#allocation4], 128
    $region29: #{tpu_custom_call.1} parent=1 // pred_fallthru
      _
    %148 = vsyncpa [#allocation3], 1
    %149 = vsyncpa [#allocation6], 1
    %150 = vsyncpa [#allocation4], 1

</llo_original>
